<compile_context>
chip_gen: v6e
topology: v6e:2x2x1
jax: 0.10.0
libtpu: 0.0.40
codegen_flags: <defaults>
</compile_context>

<pallas_src>
import functools

import jax
import jax.numpy as jnp
from jax.experimental import pallas as pl
from jax.experimental.pallas import tpu as pltpu

_SLACK = 2 * 2**20  # compiler-internal scratch slack used in planning


def _round_up(x, m):
    return ((x + m - 1) // m) * m


def _vmem_caps():
    """(planning_budget_bytes, vmem_limit_bytes), derived from the actual chip."""
    cap = 64 * 2**20  # conservative default (v7x per-TC VMEM)
    try:
        info = pltpu.get_tpu_info()
        cap = int(getattr(info, "vmem_capacity_bytes", cap))
    except Exception:
        pass
    vmem_limit = max(32 * 2**20, cap - 8 * 2**20)   # scoped limit, leave headroom
    budget = max(16 * 2**20, cap - 16 * 2**20)      # what block sizes are planned against
    return budget, vmem_limit


# --------------------------------------------------------------------------
# Fast path: fused masked-merge + chunked one-hot gather, tables VMEM-resident
# --------------------------------------------------------------------------
def _plan_fast(V, H, n_emb, itemsize, n_tok, budget):
    """Pick (T, Vb, non_table_bytes) for the resident-table path, or None."""
    Vb = min(512, V)
    table_bytes = n_emb * V * H * itemsize            # single-buffered tables
    t_cap = max(8, _round_up(n_tok, 8))
    for cand in (512, 256, 128, 64, 32, 16, 8):
        T = min(cand, t_cap)
        extra = (2 * T * 4                  # id blocks (double-buffered)
                 + 2 * T * H * itemsize     # output blocks (double-buffered)
                 + T * H * 4                # f32 accumulator scratch
                 + 2 * T * Vb * 4           # live one-hot + iota intermediates
                 + Vb * H * 4               # merged-chunk intermediate
                 + _SLACK)
        if table_bytes + extra <= budget:
            return T, Vb, extra
    return None


def _make_fused_kernel(n_emb, T, Vb, V):
    n_full = V // Vb
    rem = V - n_full * Vb

    def kernel(vals_ref, ids_ref, *refs):
        w_refs = refs[:n_emb]
        out_ref = refs[n_emb]
        acc_ref = refs[n_emb + 1]
        w_dtype = w_refs[0].dtype

        ids = ids_ref[...]                                  # (T, 1) int32
        acc_ref[...] = jnp.zeros_like(acc_ref)

        def process_chunk(off, size):
            # Masked merge of one (size, H) vocab chunk on the VPU, in the
            # weights' dtype (matches PyTorch's in-dtype `v * W` + sum).
            chunk = vals_ref[0].astype(w_dtype) * w_refs[0][pl.ds(off, size), :]
            for i in range(1, n_emb):
                chunk = chunk + vals_ref[i].astype(w_dtype) * w_refs[i][pl.ds(off, size), :]
            # Bounded (T, size) one-hot row-select on the MXU, f32 accumulate.
            col = jax.lax.broadcasted_iota(jnp.int32, (T, size), 1) + off
            onehot = (ids == col).astype(w_dtype)
            acc_ref[...] += jnp.dot(onehot, chunk,
                                    preferred_element_type=jnp.float32)

        if n_full == 1:
            process_chunk(0, Vb)
        elif n_full > 1:
            @pl.loop(0, n_full)
            def _(c):
                process_chunk(pl.multiple_of(c * Vb, Vb), Vb)
        if rem:
            process_chunk(n_full * Vb, rem)

        out_ref[...] = acc_ref[...].astype(out_ref.dtype)

    return kernel


def _fast_path(ids_2d, weights, vals, *, T, Vb, vmem_limit, single_buffer):
    n_emb = len(weights)
    V, H = weights[0].shape
    dtype = weights[0].dtype
    n_tok = ids_2d.shape[0]
    n_blocks = pl.cdiv(n_tok, T)

    # Grid-invariant index_map: tables are DMA'd into VMEM once and stay
    # resident; Buffered(1) additionally single-buffers them (halves footprint).
    table_kwargs = dict(pipeline_mode=pl.Buffered(1)) if single_buffer else {}
    table_spec = pl.BlockSpec((V, H), lambda i: (0, 0), **table_kwargs)

    kernel = _make_fused_kernel(n_emb, T, Vb, V)
    return pl.pallas_call(
        kernel,
        out_shape=jax.ShapeDtypeStruct((n_tok, H), dtype),
        grid=(n_blocks,),
        in_specs=(
            [pl.BlockSpec(memory_space=pltpu.MemorySpace.SMEM)]   # mask scalars
            + [pl.BlockSpec((T, 1), lambda i: (i, 0))]            # token-id block
            + [table_spec] * n_emb                                # resident tables
        ),
        out_specs=pl.BlockSpec((T, H), lambda i: (i, 0)),         # lane-dense (T, H)
        scratch_shapes=[pltpu.VMEM((T, H), jnp.float32)],         # f32 accumulator
        compiler_params=pltpu.CompilerParams(
            # "parallel" on v7x: each TC independently DMAs the (small) tables.
            dimension_semantics=("parallel",),
            vmem_limit_bytes=vmem_limit,
        ),
    )(vals, ids_2d, *weights)


# --------------------------------------------------------------------------
# Fallback path: row-tiled merge + HBM row-DMA gather (any vocab size)
# --------------------------------------------------------------------------
def _make_merge_kernel(n_emb):
    def kernel(vals_ref, *refs):
        w_refs = refs[:n_emb]
        out_ref = refs[n_emb]
        w_dtype = w_refs[0].dtype
        acc = vals_ref[0].astype(w_dtype) * w_refs[0][...]
        for i in range(1, n_emb):
            acc = acc + vals_ref[i].astype(w_dtype) * w_refs[i][...]
        out_ref[...] = acc.astype(out_ref.dtype)
    return kernel


def _merge_tables(weights, vals, *, budget, vmem_limit):
    n_emb = len(weights)
    V, H = weights[0].shape
    dtype = weights[0].dtype
    itemsize = jnp.dtype(dtype).itemsize

    Vb = 8
    for cand in (1024, 512, 256, 128, 64, 32, 16, 8):
        if 2 * (n_emb + 1) * cand * H * itemsize + _SLACK <= budget:
            Vb = cand
            break
    if V <= Vb:
        Vb = V

    return pl.pallas_call(
        _make_merge_kernel(n_emb),
        out_shape=jax.ShapeDtypeStruct((V, H), dtype),
        grid=(pl.cdiv(V, Vb),),
        in_specs=[pl.BlockSpec(memory_space=pltpu.MemorySpace.SMEM)]
        + [pl.BlockSpec((Vb, H), lambda i: (i, 0))] * n_emb,
        out_specs=pl.BlockSpec((Vb, H), lambda i: (i, 0)),
        compiler_params=pltpu.CompilerParams(
            dimension_semantics=("parallel",),
            vmem_limit_bytes=vmem_limit,
        ),
    )(vals, *weights)


def _make_hbm_gather_kernel(T, n_window):
    def kernel(ids_ref, merged_ref, out_ref, buf_ref, sems):
        # ids_ref:    (n_tok_pad,) int32 in SMEM (scalar-prefetched)
        # merged_ref: (V, H) merged table, left in HBM (pl.ANY)
        # out_ref:    (T, H) VMEM output block
        # buf_ref:    (T, H) VMEM gather target
        base = pl.program_id(0) * T

        def copy(r):
            row = ids_ref[base + r]
            return pltpu.make_async_copy(
                merged_ref.at[pl.ds(row, 1)],       # one (1, H) row from HBM
                buf_ref.at[pl.ds(r, 1)],
                sems.at[r % n_window],
            )

        # Sliding window of n_window outstanding row DMAs.
        @pl.loop(0, n_window)
        def _(r):
            copy(r).start()

        @pl.loop(n_window, T)
        def _(r):
            copy(r - n_window).wait()
            copy(r).start()

        @pl.loop(T - n_window, T)
        def _(r):
            copy(r).wait()

        out_ref[...] = buf_ref[...]

    return kernel


def _hbm_gather(ids_flat, merged, n_tok, *, budget, vmem_limit):
    V, H = merged.shape
    dtype = merged.dtype
    itemsize = jnp.dtype(dtype).itemsize

    T = 8
    t_cap = max(8, _round_up(n_tok, 8))
    for cand in (1024, 512, 256, 128, 64, 32, 16, 8):
        c = min(cand, t_cap)
        if 3 * c * H * itemsize + _SLACK <= budget:   # 2x out bufs + gather buf
            T = c
            break
    n_blocks = pl.cdiv(n_tok, T)
    n_window = min(8, T)

    # Pad ids with a valid row (0) so tail-row DMAs stay in bounds; padded rows
    # land only in the VMEM scratch (the final store's edge block is masked).
    need = n_blocks * T
    if ids_flat.shape[0] < need:
        ids_flat = jnp.concatenate(
            [ids_flat, jnp.zeros((need - ids_flat.shape[0],), jnp.int32)])

    return pl.pallas_call(
        _make_hbm_gather_kernel(T, n_window),
        out_shape=jax.ShapeDtypeStruct((n_tok, H), dtype),
        grid_spec=pltpu.PrefetchScalarGridSpec(
            num_scalar_prefetch=1,                         # token ids -> SMEM
            grid=(n_blocks,),
            in_specs=[pl.BlockSpec(memory_space=pl.ANY)],  # merged stays in HBM
            out_specs=pl.BlockSpec((T, H), lambda i, ids: (i, 0)),
            scratch_shapes=[pltpu.VMEM((T, H), dtype),
                            pltpu.SemaphoreType.DMA((n_window,))],
        ),
        compiler_params=pltpu.CompilerParams(
            dimension_semantics=("parallel",),
            vmem_limit_bytes=vmem_limit,
        ),
    )(ids_flat, merged)


# --------------------------------------------------------------------------
# Public wrapper
# --------------------------------------------------------------------------
def embeddings_with_masks(input_ids, weights, mask_values, *, force_hbm_gather=False):
    """Pallas implementation of EmbeddingsWithMasks.forward.

    input_ids:   integer array of token ids, any shape (e.g. (B, S)).
    weights:     list of (V, H) embedding tables (same shape/dtype).
    mask_values: list of scalar mask values (Python floats or traced scalars).
    Returns:     array of shape input_ids.shape + (H,).
    """
    weights = list(weights)
    n_emb = len(weights)
    assert n_emb >= 1 and n_emb == len(mask_values)
    V, H = weights[0].shape
    for w in weights:
        assert w.shape == (V, H) and w.dtype == weights[0].dtype
    dtype = weights[0].dtype
    itemsize = jnp.dtype(dtype).itemsize

    # Scalar mask values -> small f32 array (SMEM in the kernels); no
    # recompilation when the values change.
    vals = jnp.stack([jnp.asarray(v, jnp.float32).reshape(()) for v in mask_values])

    orig_shape = input_ids.shape
    flat_ids = input_ids.reshape(-1).astype(jnp.int32)
    n_tok = flat_ids.shape[0]

    budget, vmem_limit = _vmem_caps()

    out = None
    plan = None if force_hbm_gather else _plan_fast(V, H, n_emb, itemsize, n_tok, budget)
    if plan is not None:
        T, Vb, extra = plan
        ids_2d = flat_ids.reshape(n_tok, 1)
        run = functools.partial(_fast_path, ids_2d, weights, vals,
                                T=T, Vb=Vb, vmem_limit=vmem_limit)
        try:
            out = run(single_buffer=True)
        except Exception:
            # pl.Buffered(1) rejected by this jax/libtpu: retry with the default
            # double-buffered grid-invariant spec if the doubled table footprint
            # still fits, otherwise use the HBM-gather path below.
            if 2 * n_emb * V * H * itemsize + extra <= budget:
                out = run(single_buffer=False)

    if out is None:
        # Large-vocab / forced path: row-tiled merge, then HBM row-DMA gather.
        merged = _merge_tables(weights, vals, budget=budget, vmem_limit=vmem_limit)
        out = _hbm_gather(flat_ids, merged, n_tok, budget=budget, vmem_limit=vmem_limit)

    return out.reshape(*orig_shape, H)


def _reference(input_ids, weights, mask_values):
    merged = sum(jnp.asarray(v, w.dtype) * w for v, w in zip(mask_values, weights))
    return merged[input_ids]


if __name__ == "__main__":
    # Deterministic synthetic nn.Embedding weights + scalar masks (small shapes).
    V, H = 64, 128          # vocab, hidden
    B, S = 2, 8             # batch, seq
    v0, v1 = 2.0, 0.5       # scalar mask values

    key = jax.random.PRNGKey(0)
    k_ids, k_w0, k_w1 = jax.random.split(key, 3)
    w0 = jax.random.normal(k_w0, (V, H), dtype=jnp.float32)
    w1 = jax.random.normal(k_w1, (V, H), dtype=jnp.float32)
    input_ids = jax.random.randint(k_ids, (B, S), 0, V, dtype=jnp.int32)

    ref = _reference(input_ids, [w0, w1], [v0, v1])

    # Fast path: fused merge + chunked one-hot gather, tables VMEM-resident.
    out = embeddings_with_masks(input_ids, [w0, w1], [v0, v1])
    out = jax.block_until_ready(out)
    assert out.shape == (B, S, H)
    assert jnp.allclose(out, ref, atol=1e-5, rtol=1e-5)

    # Also exercise the large-vocab fallback (tiled merge + HBM row-DMA gather).
    out_fb = embeddings_with_masks(input_ids, [w0, w1], [v0, v1],
                                   force_hbm_gather=True)
    out_fb = jax.block_until_ready(out_fb)
    assert out_fb.shape == (B, S, H)
    assert jnp.allclose(out_fb, ref, atol=1e-5, rtol=1e-5)

    print("KERNEL_OK")
</pallas_src>

<mosaic_0001>
module attributes {stable_mosaic.version = 11 : i64} {
  func.func @kernel(%arg0: i32, %arg1: memref<2xf32, #tpu.memory_space<smem>>, %arg2: memref<16x1xi32, #tpu.memory_space<vmem>>, %arg3: memref<64x128xf32, #tpu.memory_space<vmem>>, %arg4: memref<64x128xf32, #tpu.memory_space<vmem>>, %arg5: memref<16x128xf32, #tpu.memory_space<vmem>>, %arg6: memref<16x128xf32, #tpu.memory_space<vmem>>) attributes {dimension_semantics = [#tpu.dimension_semantics<parallel>], iteration_bounds = array<i64: 1>, scalar_prefetch = 0 : i64, scratch_operands = 1 : i64, tpu.core_type = #tpu.core_type<tc>, window_params = [{transform_indices = @transform_0, window_bounds = array<i64: 2>}, {transform_indices = @transform_1, window_bounds = array<i64: 16, 1>}, {pipeline_mode = #tpu.pipeline_mode<synchronous>, transform_indices = @transform_2, window_bounds = array<i64: 64, 128>}, {pipeline_mode = #tpu.pipeline_mode<synchronous>, transform_indices = @transform_3, window_bounds = array<i64: 64, 128>}, {transform_indices = @transform_4, window_bounds = array<i64: 16, 128>}]} {
    %c0 = arith.constant 0 : index
    %c0_0 = arith.constant 0 : index
    %0 = vector.load %arg2[%c0, %c0_0] : memref<16x1xi32, #tpu.memory_space<vmem>>, vector<16x1xi32>
    %cst = arith.constant 0.000000e+00 : f32
    %1 = vector.broadcast %cst : f32 to vector<16x128xf32>
    %c0_1 = arith.constant 0 : index
    %c0_2 = arith.constant 0 : index
    %2 = vector.load %arg6[%c0_1, %c0_2] : memref<16x128xf32, #tpu.memory_space<vmem>>, vector<16x128xf32>
    tpu.vector_store %arg6[%c0_1, %c0_2], %1 {strides = array<i32>} : memref<16x128xf32, #tpu.memory_space<vmem>>, vector<16x128xf32>,
    %c0_3 = arith.constant 0 : index
    %3 = memref.load %arg1[%c0_3] : memref<2xf32, #tpu.memory_space<smem>>
    %c0_4 = arith.constant 0 : index
    %c0_5 = arith.constant 0 : index
    %4 = vector.load %arg3[%c0_4, %c0_5] : memref<64x128xf32, #tpu.memory_space<vmem>>, vector<64x128xf32>
    %5 = vector.broadcast %3 : f32 to vector<64x128xf32>
    %6 = arith.mulf %5, %4 : vector<64x128xf32>
    %c1 = arith.constant 1 : index
    %7 = memref.load %arg1[%c1] : memref<2xf32, #tpu.memory_space<smem>>
    %c0_6 = arith.constant 0 : index
    %c0_7 = arith.constant 0 : index
    %8 = vector.load %arg4[%c0_6, %c0_7] : memref<64x128xf32, #tpu.memory_space<vmem>>, vector<64x128xf32>
    %9 = vector.broadcast %7 : f32 to vector<64x128xf32>
    %10 = arith.mulf %9, %8 : vector<64x128xf32>
    %11 = arith.addf %6, %10 : vector<64x128xf32>
    %12 = tpu.iota {dimensions = array<i32: 1>} : vector<16x64xi32>
    %c0_i32 = arith.constant 0 : i32
    %13 = vector.broadcast %c0_i32 : i32 to vector<16x64xi32>
    %14 = arith.addi %12, %13 : vector<16x64xi32>
    %15 = vector.broadcast %0 : vector<16x1xi32> to vector<16x64xi32>
    %16 = arith.cmpi eq, %15, %14 : vector<16x64xi32>
    %17 = arith.extui %16 : vector<16x64xi1> to vector<16x64xi32>
    %18 = arith.sitofp %17 : vector<16x64xi32> to vector<16x64xf32>
    %c0_8 = arith.constant 0 : index
    %c0_9 = arith.constant 0 : index
    %19 = vector.load %arg6[%c0_8, %c0_9] : memref<16x128xf32, #tpu.memory_space<vmem>>, vector<16x128xf32>
    %cst_10 = arith.constant dense<0.000000e+00> : vector<16x128xf32>
    %20 = tpu.matmul %18, %11, %cst_10 {dimension_numbers = #tpu.dot_dimension_numbers<[1], [0], [0], [1], [0, 0, 1, 1], [], []>} : vector<16x64xf32>, vector<64x128xf32>, vector<16x128xf32> -> vector<16x128xf32>
    %21 = arith.addf %19, %20 : vector<16x128xf32>
    %c0_11 = arith.constant 0 : index
    %c0_12 = arith.constant 0 : index
    %22 = vector.load %arg6[%c0_11, %c0_12] : memref<16x128xf32, #tpu.memory_space<vmem>>, vector<16x128xf32>
    tpu.vector_store %arg6[%c0_11, %c0_12], %21 {strides = array<i32>} : memref<16x128xf32, #tpu.memory_space<vmem>>, vector<16x128xf32>,
    %c0_13 = arith.constant 0 : index
    %c0_14 = arith.constant 0 : index
    %23 = vector.load %arg6[%c0_13, %c0_14] : memref<16x128xf32, #tpu.memory_space<vmem>>, vector<16x128xf32>
    %c0_15 = arith.constant 0 : index
    %c0_16 = arith.constant 0 : index
    %24 = vector.load %arg5[%c0_15, %c0_16] : memref<16x128xf32, #tpu.memory_space<vmem>>, vector<16x128xf32>
    tpu.vector_store %arg5[%c0_15, %c0_16], %23 {strides = array<i32>} : memref<16x128xf32, #tpu.memory_space<vmem>>, vector<16x128xf32>,
    return
  }
  func.func @transform_0(%arg0: i32) -> i32 {
    %c0_i32 = arith.constant 0 : i32
    %c0_i32_0 = arith.constant 0 : i32
    return %c0_i32 : i32
  }
  func.func @transform_1(%arg0: i32) -> (i32, i32) {
    %c0_i32 = arith.constant 0 : i32
    %c0_i32_0 = arith.constant 0 : i32
    return %arg0, %c0_i32 : i32, i32
  }
  func.func @transform_2(%arg0: i32) -> (i32, i32) {
    %c0_i32 = arith.constant 0 : i32
    %c0_i32_0 = arith.constant 0 : i32
    %c0_i32_1 = arith.constant 0 : i32
    return %c0_i32, %c0_i32_0 : i32, i32
  }
  func.func @transform_3(%arg0: i32) -> (i32, i32) {
    %c0_i32 = arith.constant 0 : i32
    %c0_i32_0 = arith.constant 0 : i32
    %c0_i32_1 = arith.constant 0 : i32
    return %c0_i32, %c0_i32_0 : i32, i32
  }
  func.func @transform_4(%arg0: i32) -> (i32, i32) {
    %c0_i32 = arith.constant 0 : i32
    %c0_i32_0 = arith.constant 0 : i32
    return %arg0, %c0_i32 : i32, i32
  }
}

module attributes {stable_mosaic.version = 11 : i64} {
  func.func @kernel(%arg0: i32, %arg1: memref<2xf32, #tpu.memory_space<smem>>, %arg2: memref<16x1xi32, #tpu.memory_space<vmem>>, %arg3: memref<64x128xf32, #tpu.memory_space<vmem>>, %arg4: memref<64x128xf32, #tpu.memory_space<vmem>>, %arg5: memref<16x128xf32, #tpu.memory_space<vmem>>, %arg6: memref<16x128xf32, #tpu.memory_space<vmem>>) attributes {dimension_semantics = [#tpu.dimension_semantics<parallel>], iteration_bounds = array<i64: 1>, scalar_prefetch = 0 : i64, scratch_operands = 1 : i64, tpu.core_type = #tpu.core_type<tc>, window_params = [{transform_indices = @transform_0, window_bounds = array<i64: 2>}, {transform_indices = @transform_1, window_bounds = array<i64: 16, 1>}, {pipeline_mode = #tpu.pipeline_mode<synchronous>, transform_indices = @transform_2, window_bounds = array<i64: 64, 128>}, {pipeline_mode = #tpu.pipeline_mode<synchronous>, transform_indices = @transform_3, window_bounds = array<i64: 64, 128>}, {transform_indices = @transform_4, window_bounds = array<i64: 16, 128>}]} {
    %c0 = arith.constant 0 : index
    %c0_0 = arith.constant 0 : index
    %0 = vector.load %arg2[%c0, %c0_0] : memref<16x1xi32, #tpu.memory_space<vmem>>, vector<16x1xi32>
    %cst = arith.constant 0.000000e+00 : f32
    %1 = vector.broadcast %cst : f32 to vector<16x128xf32>
    %c0_1 = arith.constant 0 : index
    %c0_2 = arith.constant 0 : index
    %2 = vector.load %arg6[%c0_1, %c0_2] : memref<16x128xf32, #tpu.memory_space<vmem>>, vector<16x128xf32>
    tpu.vector_store %arg6[%c0_1, %c0_2], %1 {strides = array<i32>} : memref<16x128xf32, #tpu.memory_space<vmem>>, vector<16x128xf32>,
    %c0_3 = arith.constant 0 : index
    %3 = memref.load %arg1[%c0_3] : memref<2xf32, #tpu.memory_space<smem>>
    %c0_4 = arith.constant 0 : index
    %c0_5 = arith.constant 0 : index
    %4 = vector.load %arg3[%c0_4, %c0_5] : memref<64x128xf32, #tpu.memory_space<vmem>>, vector<64x128xf32>
    %5 = vector.broadcast %3 : f32 to vector<64x128xf32>
    %6 = arith.mulf %5, %4 : vector<64x128xf32>
    %c1 = arith.constant 1 : index
    %7 = memref.load %arg1[%c1] : memref<2xf32, #tpu.memory_space<smem>>
    %c0_6 = arith.constant 0 : index
    %c0_7 = arith.constant 0 : index
    %8 = vector.load %arg4[%c0_6, %c0_7] : memref<64x128xf32, #tpu.memory_space<vmem>>, vector<64x128xf32>
    %9 = vector.broadcast %7 : f32 to vector<64x128xf32>
    %10 = arith.mulf %9, %8 : vector<64x128xf32>
    %11 = arith.addf %6, %10 : vector<64x128xf32>
    %12 = tpu.iota {dimensions = array<i32: 1>} : vector<16x64xi32>
    %c0_i32 = arith.constant 0 : i32
    %13 = vector.broadcast %c0_i32 : i32 to vector<16x64xi32>
    %14 = arith.addi %12, %13 : vector<16x64xi32>
    %15 = vector.broadcast %0 : vector<16x1xi32> to vector<16x64xi32>
    %16 = arith.cmpi eq, %15, %14 : vector<16x64xi32>
    %17 = arith.extui %16 : vector<16x64xi1> to vector<16x64xi32>
    %18 = arith.sitofp %17 : vector<16x64xi32> to vector<16x64xf32>
    %c0_8 = arith.constant 0 : index
    %c0_9 = arith.constant 0 : index
    %19 = vector.load %arg6[%c0_8, %c0_9] : memref<16x128xf32, #tpu.memory_space<vmem>>, vector<16x128xf32>
    %cst_10 = arith.constant dense<0.000000e+00> : vector<16x128xf32>
    %20 = tpu.matmul %18, %11, %cst_10 {dimension_numbers = #tpu.dot_dimension_numbers<[1], [0], [0], [1], [0, 0, 1, 1], [], []>} : vector<16x64xf32>, vector<64x128xf32>, vector<16x128xf32> -> vector<16x128xf32>
    %21 = arith.addf %19, %20 : vector<16x128xf32>
    %c0_11 = arith.constant 0 : index
    %c0_12 = arith.constant 0 : index
    %22 = vector.load %arg6[%c0_11, %c0_12] : memref<16x128xf32, #tpu.memory_space<vmem>>, vector<16x128xf32>
    tpu.vector_store %arg6[%c0_11, %c0_12], %21 {strides = array<i32>} : memref<16x128xf32, #tpu.memory_space<vmem>>, vector<16x128xf32>,
    %c0_13 = arith.constant 0 : index
    %c0_14 = arith.constant 0 : index
    %23 = vector.load %arg6[%c0_13, %c0_14] : memref<16x128xf32, #tpu.memory_space<vmem>>, vector<16x128xf32>
    %c0_15 = arith.constant 0 : index
    %c0_16 = arith.constant 0 : index
    %24 = vector.load %arg5[%c0_15, %c0_16] : memref<16x128xf32, #tpu.memory_space<vmem>>, vector<16x128xf32>
    tpu.vector_store %arg5[%c0_15, %c0_16], %23 {strides = array<i32>} : memref<16x128xf32, #tpu.memory_space<vmem>>, vector<16x128xf32>,
    return
  }
  func.func @transform_0(%arg0: i32) -> i32 {
    %c0_i32 = arith.constant 0 : i32
    %c0_i32_0 = arith.constant 0 : i32
    return %c0_i32 : i32
  }
  func.func @transform_1(%arg0: i32) -> (i32, i32) {
    %c0_i32 = arith.constant 0 : i32
    %c0_i32_0 = arith.constant 0 : i32
    return %arg0, %c0_i32 : i32, i32
  }
  func.func @transform_2(%arg0: i32) -> (i32, i32) {
    %c0_i32 = arith.constant 0 : i32
    %c0_i32_0 = arith.constant 0 : i32
    %c0_i32_1 = arith.constant 0 : i32
    return %c0_i32, %c0_i32_0 : i32, i32
  }
  func.func @transform_3(%arg0: i32) -> (i32, i32) {
    %c0_i32 = arith.constant 0 : i32
    %c0_i32_0 = arith.constant 0 : i32
    %c0_i32_1 = arith.constant 0 : i32
    return %c0_i32, %c0_i32_0 : i32, i32
  }
  func.func @transform_4(%arg0: i32) -> (i32, i32) {
    %c0_i32 = arith.constant 0 : i32
    %c0_i32_0 = arith.constant 0 : i32
    return %arg0, %c0_i32 : i32, i32
  }
}

</mosaic_0001>

<llo_original>
// kernel: tpu_custom_call.1
$region0: #{tpu_custom_call.1}
  #allocation0 [shape = 'u32[]', space=smem, size = 0x4, offset = 0x4, fixed_abs, tag = 'smem constant byte address 0x4 - core index']
  #allocation1 [shape = 'u32[144,128]{1,0:T(1,128)}', space=vmem, size = 0x12000, scoped, tag = 'internal scratch']
  #allocation2 [shape = 'f32[16,128]{1,0:T(8,128)}', space=vmem, size = 0x2000, scoped, tag = 'scratch operand']
  %s0 = inlined_call_operand.vmem [shape: f32[2], index: 0, kind: input, shape index: {}]
  %s1 = inlined_call_operand.vmem [shape: s32[16,1], index: 1, kind: input, shape index: {}]
  %s2 = inlined_call_operand.hbm [shape: f32[64,128], index: 2, kind: input, shape index: {}]
  %s3 = inlined_call_operand.hbm [shape: f32[64,128], index: 3, kind: input, shape index: {}]
  %s4 = inlined_call_operand.hbm [shape: f32[16,128], index: 4, kind: output, shape index: {}]
  %s5 = sld [smem:[#allocation0]]
  $region38: #{tpu_custom_call.1} parent=0
    _
  %s7 = ssub.s32 1, %s5
  %s8 = scalar_select 0, %s7, %s5
  $region1: #{tpu_custom_call.1} parent=0
    #allocation3 [shape = 'u8[512]{0}', space=smem, size = 0x200, scoped, tag = 'input window, operand 0, single buffered']
    #allocation4 [shape = 's32[1]{0}', space=sflag, size = 0x4, scoped, tag = 'scoped memory for tpu_custom_call.1']
    #allocation5 [shape = 's32[1]{0}', space=sflag, size = 0x4, scoped, tag = 'scoped memory for tpu_custom_call.1']
    #allocation6 [shape = 's32[1]{0}', space=sflag, size = 0x4, scoped, tag = 'scoped memory for tpu_custom_call.1']
    #allocation7 [shape = 'u8[32768]{0}', space=vmem, size = 0x8000, scoped, tag = 'input window, operand 2, single buffered']
    #allocation8 [shape = 'u8[32768]{0}', space=vmem, size = 0x8000, scoped, tag = 'input window, operand 3, single buffered']
    #allocation9 [shape = 's32[1]{0}', space=sflag, size = 0x4, scoped, tag = 'scoped memory for tpu_custom_call.1']
    #allocation10 [shape = 'u8[8192]{0}', space=vmem, size = 0x2000, scoped, tag = 'output window, operand 0, single buffered']
    %9 = vsyncpa [#allocation6], 0
    %10 = vsyncpa [#allocation4], 0
    %11 = vsyncpa [#allocation9], 0
    %12 = vsyncpa [#allocation5], 0
    // Predicated region
    $region2: #{tpu_custom_call.1} parent=1 // pred_check
      _
    $region3: #{tpu_custom_call.1} parent=1 // pred_check_branch
      %14 = sbr.rel (0) target = $region5
    $region4: #{tpu_custom_call.1} parent=1 // pred_region
      %s16 = ssub.s32 16, 16
      %17 = vsyncadd [#allocation6], %s16
      %s19 = sshll.u32 %s0, 4
      %s20 = int_to_ptr.vmem [resolvable:$true] %s19
      %22 = dma.vmem_to_smem %s20, 16, [#allocation3], [#allocation6]
    $region5: #{tpu_custom_call.1} parent=1 // pred_fallthru
      _
    // Predicated region
    $region6: #{tpu_custom_call.1} parent=1 // pred_check
      _
    $region7: #{tpu_custom_call.1} parent=1 // pred_check_branch
      %24 = sbr.rel (0) target = $region9
    $region8: #{tpu_custom_call.1} parent=1 // pred_region
      _
    $region9: #{tpu_custom_call.1} parent=1 // pred_fallthru
      _
    // Predicated region
    $region10: #{tpu_custom_call.1} parent=1 // pred_check
      _
    $region11: #{tpu_custom_call.1} parent=1 // pred_check_branch
      %26 = sbr.rel (0) target = $region13
    $region12: #{tpu_custom_call.1} parent=1 // pred_region
      %s28 = ssub.s32 1024, 1024
      %29 = vsyncadd [#allocation4], %s28
      %s30 = sshll.u32 [#allocation7], 4
      %s31 = int_to_ptr.vmem [resolvable:$true] %s30
      %36 = dma.hbm_to_vmem [thread:$0]  %s2, 1024, %s31, [#allocation4], 128, 128, 8
    $region13: #{tpu_custom_call.1} parent=1 // pred_fallthru
      _
    // Predicated region
    $region14: #{tpu_custom_call.1} parent=1 // pred_check
      _
    $region15: #{tpu_custom_call.1} parent=1 // pred_check_branch
      %38 = sbr.rel (0) target = $region17
    $region16: #{tpu_custom_call.1} parent=1 // pred_region
      %s40 = ssub.s32 1024, 1024
      %41 = vsyncadd [#allocation9], %s40
      %s42 = sshll.u32 [#allocation8], 4
      %s43 = int_to_ptr.vmem [resolvable:$true] %s42
      %48 = dma.hbm_to_vmem [thread:$0]  %s3, 1024, %s43, [#allocation9], 128, 128, 8
    $region17: #{tpu_custom_call.1} parent=1 // pred_fallthru
      _
    // Predicated region
    $region18: #{tpu_custom_call.1} parent=1 // pred_check
      _
    $region19: #{tpu_custom_call.1} parent=1 // pred_check_branch
      %50 = sbr.rel (0) target = $region21
    $region20: #{tpu_custom_call.1} parent=1 // pred_region
      %51 = dma.done [#allocation6], 16
    $region21: #{tpu_custom_call.1} parent=1 // pred_fallthru
      _
    // Predicated region
    $region22: #{tpu_custom_call.1} parent=1 // pred_check
      _
    $region23: #{tpu_custom_call.1} parent=1 // pred_check_branch
      %53 = sbr.rel (0) target = $region25
    $region24: #{tpu_custom_call.1} parent=1 // pred_region
      %54 = dma.done [#allocation4], 1024
    $region25: #{tpu_custom_call.1} parent=1 // pred_fallthru
      _
    // Predicated region
    $region26: #{tpu_custom_call.1} parent=1 // pred_check
      _
    $region27: #{tpu_custom_call.1} parent=1 // pred_check_branch
      %56 = sbr.rel (0) target = $region29
    $region28: #{tpu_custom_call.1} parent=1 // pred_region
      %57 = dma.done [#allocation9], 1024
    $region29: #{tpu_custom_call.1} parent=1 // pred_fallthru
      _
    %58 = sfence
    %v59 = vld [vmem:[%s1] sm:$0xff]
    %v60 = vld [vmem:[%s1 + $0x8] sm:$0xff]
    %61 = vst [vmem:[#allocation2] sm:$0xff] 0.0
    %62 = vst [vmem:[#allocation2 + $0x8] sm:$0xff] 0.0
    %s63 = sld [smem:[#allocation3]]
    %v64 = vld [vmem:[#allocation7] sm:$0xff]
    %v65 = vld [vmem:[#allocation7 + $0x8] sm:$0xff]
    %v66 = vld [vmem:[#allocation7 + $0x10] sm:$0xff]
    %v67 = vld [vmem:[#allocation7 + $0x18] sm:$0xff]
    %v68 = vld [vmem:[#allocation7 + $0x20] sm:$0xff]
    %v69 = vld [vmem:[#allocation7 + $0x28] sm:$0xff]
    %v70 = vld [vmem:[#allocation7 + $0x30] sm:$0xff]
    %v71 = vld [vmem:[#allocation7 + $0x38] sm:$0xff]
    %v72 = vstv %s63
    %v73 = vmul.f32 %v72, %v64
    %v74 = vmul.f32 %v72, %v65
    %v75 = vmul.f32 %v72, %v66
    %v76 = vmul.f32 %v72, %v67
    %v77 = vmul.f32 %v72, %v68
    %v78 = vmul.f32 %v72, %v69
    %v79 = vmul.f32 %v72, %v70
    %v80 = vmul.f32 %v72, %v71
    %s81 = sld [smem:[#allocation3 + $0x1]]
    %v82 = vld [vmem:[#allocation8] sm:$0xff]
    %v83 = vld [vmem:[#allocation8 + $0x8] sm:$0xff]
    %v84 = vld [vmem:[#allocation8 + $0x10] sm:$0xff]
    %v85 = vld [vmem:[#allocation8 + $0x18] sm:$0xff]
    %v86 = vld [vmem:[#allocation8 + $0x20] sm:$0xff]
    %v87 = vld [vmem:[#allocation8 + $0x28] sm:$0xff]
    %v88 = vld [vmem:[#allocation8 + $0x30] sm:$0xff]
    %v89 = vld [vmem:[#allocation8 + $0x38] sm:$0xff]
    %v90 = vstv %s81
    %v91 = vmul.f32 %v90, %v82
    %v92 = vmul.f32 %v90, %v83
    %v93 = vmul.f32 %v90, %v84
    %v94 = vmul.f32 %v90, %v85
    %v95 = vmul.f32 %v90, %v86
    %v96 = vmul.f32 %v90, %v87
    %v97 = vmul.f32 %v90, %v88
    %v98 = vmul.f32 %v90, %v89
    %v99 = vadd.f32 %v73, %v91
    %v100 = vadd.f32 %v74, %v92
    %v101 = vadd.f32 %v75, %v93
    %v102 = vadd.f32 %v76, %v94
    %v103 = vadd.f32 %v77, %v95
    %v104 = vadd.f32 %v78, %v96
    %v105 = vadd.f32 %v79, %v97
    %v106 = vadd.f32 %v80, %v98
    %v107 = vlaneseq
    %v108 = vand.u32 %v107, 127
    %109 = vset.pattern.permute.xlu0 0
    %110 = vperm.xlu0 %109, %v59
    %v111 = vpop.permute.xlu0 %110
    %112 = vset.pattern.permute.xlu0 0
    %113 = vperm.xlu0 %112, %v60
    %v114 = vpop.permute.xlu0 %113
    %vm115 = vcmp.eq.s32.totalorder %v111, %v108
    %vm116 = vcmp.eq.s32.totalorder %v114, %v108
    %v117 = vsel %vm115, 1, 0
    %v118 = vsel %vm116, 1, 0
    %v119 = vcvt.s32.f32 %v117
    %v120 = vcvt.s32.f32 %v118
    %v121 = vld [vmem:[#allocation2] sm:$0xff]
    %v122 = vld [vmem:[#allocation2 + $0x8] sm:$0xff]
    %vm123 = vcmask 523264
    %v125 = vsel %vm123, %v119, 0
    %v128 = vsel %vm123, %v120, 0
    %130 = vmatprep.subr.mxu0 0.0
    %131 = vmatpush1.msra.mxu0 0.0
    %132 = vmatprep.subr.mxu0 0.0
    %133 = vmatpush1.msra.mxu0 0.0
    %134 = vmatprep.subr.mxu0 0.0
    %135 = vmatpush1.msra.mxu0 0.0
    %136 = vmatprep.subr.mxu0 0.0
    %137 = vmatpush1.msra.mxu0 0.0
    %138 = vmatprep.subr.mxu0 0.0
    %139 = vmatpush1.msra.mxu0 0.0
    %140 = vmatprep.subr.mxu0 0.0
    %141 = vmatpush1.msra.mxu0 0.0
    %142 = vmatprep.subr.mxu0 0.0
    %143 = vmatpush1.msra.mxu0 0.0
    %144 = vmatprep.subr.mxu0 0.0
    %145 = vmatpush1.msra.mxu0 0.0
    %146 = vmatprep.subr.mxu0 0.0
    %147 = vmatpush1.msra.mxu0 %v106
    %148 = vmatprep.subr.mxu0 0.0
    %149 = vmatpush1.msra.mxu0 %v105
    %150 = vmatprep.subr.mxu0 0.0
    %151 = vmatpush1.msra.mxu0 %v104
    %152 = vmatprep.subr.mxu0 0.0
    %153 = vmatpush1.msra.mxu0 %v103
    %154 = vmatprep.subr.mxu0 0.0
    %155 = vmatpush1.msra.mxu0 %v102
    %156 = vmatprep.subr.mxu0 0.0
    %157 = vmatpush1.msra.mxu0 %v101
    %158 = vmatprep.subr.mxu0 0.0
    %159 = vmatpush1.msra.mxu0 %v100
    %160 = vmatprep.subr.mxu0 0.0
    %161 = vmatpush1.msra.mxu0 %v99
    %162 = vmatprep.subr.mxu0 0.0
    %163 = vmatpush2.msra.mxu0 0.0
    %164 = vmatprep.subr.mxu0 0.0
    %165 = vmatpush2.msra.mxu0 0.0
    %166 = vmatprep.subr.mxu0 0.0
    %167 = vmatpush2.msra.mxu0 0.0
    %168 = vmatprep.subr.mxu0 0.0
    %169 = vmatpush2.msra.mxu0 0.0
    %170 = vmatprep.subr.mxu0 0.0
    %171 = vmatpush2.msra.mxu0 0.0
    %172 = vmatprep.subr.mxu0 0.0
    %173 = vmatpush2.msra.mxu0 0.0
    %174 = vmatprep.subr.mxu0 0.0
    %175 = vmatpush2.msra.mxu0 0.0
    %176 = vmatprep.subr.mxu0 0.0
    %177 = vmatpush2.msra.mxu0 0.0
    %178 = vmatprep.subr.mxu0 0.0
    %179 = vmatpush2.msra.mxu0 0.0
    %180 = vmatprep.subr.mxu0 0.0
    %181 = vmatpush2.msra.mxu0 0.0
    %182 = vmatprep.subr.mxu0 0.0
    %183 = vmatpush2.msra.mxu0 0.0
    %184 = vmatprep.subr.mxu0 0.0
    %185 = vmatpush2.msra.mxu0 0.0
    %186 = vmatprep.subr.mxu0 0.0
    %187 = vmatpush2.msra.mxu0 0.0
    %188 = vmatprep.subr.mxu0 0.0
    %189 = vmatpush2.msra.mxu0 0.0
    %190 = vmatprep.subr.mxu0 0.0
    %191 = vmatpush2.msra.mxu0 0.0
    %192 = vmatprep.subr.mxu0 0.0
    %193 = vmatpush2.msra.mxu0 0.0
    %194 = vmatprep.mubr.f32.mxu0 0.0
    %195 = vmatmul.mubr.f32.gmra.mxu0 %v125
    %v196 = vpop.f32.mrf.mxu0
    %v197 = vadd.f32 0.0, %v196
    %v198 = vpop.f32.mrf.mxu0
    %199 = vmatprep.mubr.f32.mxu0 0.0
    %200 = vmatmul.mubr.f32.gmra.mxu0 %v128
    %v201 = vpop.f32.mrf.mxu0
    %v202 = vadd.f32 0.0, %v201
    %v203 = vpop.f32.mrf.mxu0
    %204 = vdwg.mxu0
    %v205 = vadd.f32 %v121, %v197
    %v206 = vadd.f32 %v122, %v202
    %207 = vst [vmem:[#allocation2] sm:$0xff] %v205
    %208 = vst [vmem:[#allocation2 + $0x8] sm:$0xff] %v206
    %v209 = vld [vmem:[#allocation2] sm:$0xff]
    %v210 = vld [vmem:[#allocation2 + $0x8] sm:$0xff]
    %211 = vst [vmem:[#allocation10] sm:$0xff] %v209
    %212 = vst [vmem:[#allocation10 + $0x8] sm:$0xff] %v210
    // Predicated region
    $region30: #{tpu_custom_call.1} parent=1 // pred_check
      _
    $region31: #{tpu_custom_call.1} parent=1 // pred_check_branch
      %214 = sbr.rel (0) target = $region33
    $region32: #{tpu_custom_call.1} parent=1 // pred_region
      %s216 = ssub.s32 256, 256
      %217 = vsyncadd [#allocation5], %s216
      %s218 = sshll.u32 [#allocation10], 4
      %s219 = int_to_ptr.vmem [resolvable:$true] %s218
      %224 = dma.vmem_to_hbm [thread:$0]  %s219, 256, %s4, [#allocation5], 128, 128, 8
    $region33: #{tpu_custom_call.1} parent=1 // pred_fallthru
      _
    // Predicated region
    $region34: #{tpu_custom_call.1} parent=1 // pred_check
      _
    $region35: #{tpu_custom_call.1} parent=1 // pred_check_branch
      %226 = sbr.rel (0) target = $region37
    $region36: #{tpu_custom_call.1} parent=1 // pred_region
      %227 = dma.done [#allocation5], 256
    $region37: #{tpu_custom_call.1} parent=1 // pred_fallthru
      _
    %228 = vsyncpa [#allocation4], 1
    %229 = vsyncpa [#allocation9], 1
    %230 = vsyncpa [#allocation5], 1
    %231 = vsyncpa [#allocation6], 1

// kernel: tpu_custom_call.1
$region0: #{tpu_custom_call.1}
  #allocation0 [shape = 'u32[]', space=smem, size = 0x4, offset = 0x4, fixed_abs, tag = 'smem constant byte address 0x4 - core index']
  #allocation1 [shape = 'u32[144,128]{1,0:T(1,128)}', space=vmem, size = 0x12000, scoped, tag = 'internal scratch']
  #allocation2 [shape = 'f32[16,128]{1,0:T(8,128)}', space=vmem, size = 0x2000, scoped, tag = 'scratch operand']
  %s0 = inlined_call_operand.vmem [shape: f32[2], index: 0, kind: input, shape index: {}]
  %s1 = inlined_call_operand.vmem [shape: s32[16,1], index: 1, kind: input, shape index: {}]
  %s2 = inlined_call_operand.hbm [shape: f32[64,128], index: 2, kind: input, shape index: {}]
  %s3 = inlined_call_operand.hbm [shape: f32[64,128], index: 3, kind: input, shape index: {}]
  %s4 = inlined_call_operand.hbm [shape: f32[16,128], index: 4, kind: output, shape index: {}]
  %s5 = sld [smem:[#allocation0]]
  $region38: #{tpu_custom_call.1} parent=0
    _
  %s7 = ssub.s32 1, %s5
  %s8 = scalar_select 0, %s7, %s5
  $region1: #{tpu_custom_call.1} parent=0
    #allocation3 [shape = 'u8[512]{0}', space=smem, size = 0x200, scoped, tag = 'input window, operand 0, single buffered']
    #allocation4 [shape = 's32[1]{0}', space=sflag, size = 0x4, scoped, tag = 'scoped memory for tpu_custom_call.1']
    #allocation5 [shape = 's32[1]{0}', space=sflag, size = 0x4, scoped, tag = 'scoped memory for tpu_custom_call.1']
    #allocation6 [shape = 's32[1]{0}', space=sflag, size = 0x4, scoped, tag = 'scoped memory for tpu_custom_call.1']
    #allocation7 [shape = 'u8[32768]{0}', space=vmem, size = 0x8000, scoped, tag = 'input window, operand 2, single buffered']
    #allocation8 [shape = 'u8[32768]{0}', space=vmem, size = 0x8000, scoped, tag = 'input window, operand 3, single buffered']
    #allocation9 [shape = 's32[1]{0}', space=sflag, size = 0x4, scoped, tag = 'scoped memory for tpu_custom_call.1']
    #allocation10 [shape = 'u8[8192]{0}', space=vmem, size = 0x2000, scoped, tag = 'output window, operand 0, single buffered']
    %9 = vsyncpa [#allocation6], 0
    %10 = vsyncpa [#allocation4], 0
    %11 = vsyncpa [#allocation9], 0
    %12 = vsyncpa [#allocation5], 0
    // Predicated region
    $region2: #{tpu_custom_call.1} parent=1 // pred_check
      _
    $region3: #{tpu_custom_call.1} parent=1 // pred_check_branch
      %14 = sbr.rel (0) target = $region5
    $region4: #{tpu_custom_call.1} parent=1 // pred_region
      %s16 = ssub.s32 16, 16
      %17 = vsyncadd [#allocation6], %s16
      %s19 = sshll.u32 %s0, 4
      %s20 = int_to_ptr.vmem [resolvable:$true] %s19
      %22 = dma.vmem_to_smem %s20, 16, [#allocation3], [#allocation6]
    $region5: #{tpu_custom_call.1} parent=1 // pred_fallthru
      _
    // Predicated region
    $region6: #{tpu_custom_call.1} parent=1 // pred_check
      _
    $region7: #{tpu_custom_call.1} parent=1 // pred_check_branch
      %24 = sbr.rel (0) target = $region9
    $region8: #{tpu_custom_call.1} parent=1 // pred_region
      _
    $region9: #{tpu_custom_call.1} parent=1 // pred_fallthru
      _
    // Predicated region
    $region10: #{tpu_custom_call.1} parent=1 // pred_check
      _
    $region11: #{tpu_custom_call.1} parent=1 // pred_check_branch
      %26 = sbr.rel (0) target = $region13
    $region12: #{tpu_custom_call.1} parent=1 // pred_region
      %s28 = ssub.s32 1024, 1024
      %29 = vsyncadd [#allocation4], %s28
      %s30 = sshll.u32 [#allocation7], 4
      %s31 = int_to_ptr.vmem [resolvable:$true] %s30
      %36 = dma.hbm_to_vmem [thread:$0]  %s2, 1024, %s31, [#allocation4], 128, 128, 8
    $region13: #{tpu_custom_call.1} parent=1 // pred_fallthru
      _
    // Predicated region
    $region14: #{tpu_custom_call.1} parent=1 // pred_check
      _
    $region15: #{tpu_custom_call.1} parent=1 // pred_check_branch
      %38 = sbr.rel (0) target = $region17
    $region16: #{tpu_custom_call.1} parent=1 // pred_region
      %s40 = ssub.s32 1024, 1024
      %41 = vsyncadd [#allocation9], %s40
      %s42 = sshll.u32 [#allocation8], 4
      %s43 = int_to_ptr.vmem [resolvable:$true] %s42
      %48 = dma.hbm_to_vmem [thread:$0]  %s3, 1024, %s43, [#allocation9], 128, 128, 8
    $region17: #{tpu_custom_call.1} parent=1 // pred_fallthru
      _
    // Predicated region
    $region18: #{tpu_custom_call.1} parent=1 // pred_check
      _
    $region19: #{tpu_custom_call.1} parent=1 // pred_check_branch
      %50 = sbr.rel (0) target = $region21
    $region20: #{tpu_custom_call.1} parent=1 // pred_region
      %51 = dma.done [#allocation6], 16
    $region21: #{tpu_custom_call.1} parent=1 // pred_fallthru
      _
    // Predicated region
    $region22: #{tpu_custom_call.1} parent=1 // pred_check
      _
    $region23: #{tpu_custom_call.1} parent=1 // pred_check_branch
      %53 = sbr.rel (0) target = $region25
    $region24: #{tpu_custom_call.1} parent=1 // pred_region
      %54 = dma.done [#allocation4], 1024
    $region25: #{tpu_custom_call.1} parent=1 // pred_fallthru
      _
    // Predicated region
    $region26: #{tpu_custom_call.1} parent=1 // pred_check
      _
    $region27: #{tpu_custom_call.1} parent=1 // pred_check_branch
      %56 = sbr.rel (0) target = $region29
    $region28: #{tpu_custom_call.1} parent=1 // pred_region
      %57 = dma.done [#allocation9], 1024
    $region29: #{tpu_custom_call.1} parent=1 // pred_fallthru
      _
    %58 = sfence
    %v59 = vld [vmem:[%s1] sm:$0xff]
    %v60 = vld [vmem:[%s1 + $0x8] sm:$0xff]
    %61 = vst [vmem:[#allocation2] sm:$0xff] 0.0
    %62 = vst [vmem:[#allocation2 + $0x8] sm:$0xff] 0.0
    %s63 = sld [smem:[#allocation3]]
    %v64 = vld [vmem:[#allocation7] sm:$0xff]
    %v65 = vld [vmem:[#allocation7 + $0x8] sm:$0xff]
    %v66 = vld [vmem:[#allocation7 + $0x10] sm:$0xff]
    %v67 = vld [vmem:[#allocation7 + $0x18] sm:$0xff]
    %v68 = vld [vmem:[#allocation7 + $0x20] sm:$0xff]
    %v69 = vld [vmem:[#allocation7 + $0x28] sm:$0xff]
    %v70 = vld [vmem:[#allocation7 + $0x30] sm:$0xff]
    %v71 = vld [vmem:[#allocation7 + $0x38] sm:$0xff]
    %v72 = vstv %s63
    %v73 = vmul.f32 %v72, %v64
    %v74 = vmul.f32 %v72, %v65
    %v75 = vmul.f32 %v72, %v66
    %v76 = vmul.f32 %v72, %v67
    %v77 = vmul.f32 %v72, %v68
    %v78 = vmul.f32 %v72, %v69
    %v79 = vmul.f32 %v72, %v70
    %v80 = vmul.f32 %v72, %v71
    %s81 = sld [smem:[#allocation3 + $0x1]]
    %v82 = vld [vmem:[#allocation8] sm:$0xff]
    %v83 = vld [vmem:[#allocation8 + $0x8] sm:$0xff]
    %v84 = vld [vmem:[#allocation8 + $0x10] sm:$0xff]
    %v85 = vld [vmem:[#allocation8 + $0x18] sm:$0xff]
    %v86 = vld [vmem:[#allocation8 + $0x20] sm:$0xff]
    %v87 = vld [vmem:[#allocation8 + $0x28] sm:$0xff]
    %v88 = vld [vmem:[#allocation8 + $0x30] sm:$0xff]
    %v89 = vld [vmem:[#allocation8 + $0x38] sm:$0xff]
    %v90 = vstv %s81
    %v91 = vmul.f32 %v90, %v82
    %v92 = vmul.f32 %v90, %v83
    %v93 = vmul.f32 %v90, %v84
    %v94 = vmul.f32 %v90, %v85
    %v95 = vmul.f32 %v90, %v86
    %v96 = vmul.f32 %v90, %v87
    %v97 = vmul.f32 %v90, %v88
    %v98 = vmul.f32 %v90, %v89
    %v99 = vadd.f32 %v73, %v91
    %v100 = vadd.f32 %v74, %v92
    %v101 = vadd.f32 %v75, %v93
    %v102 = vadd.f32 %v76, %v94
    %v103 = vadd.f32 %v77, %v95
    %v104 = vadd.f32 %v78, %v96
    %v105 = vadd.f32 %v79, %v97
    %v106 = vadd.f32 %v80, %v98
    %v107 = vlaneseq
    %v108 = vand.u32 %v107, 127
    %109 = vset.pattern.permute.xlu0 0
    %110 = vperm.xlu0 %109, %v59
    %v111 = vpop.permute.xlu0 %110
    %112 = vset.pattern.permute.xlu0 0
    %113 = vperm.xlu0 %112, %v60
    %v114 = vpop.permute.xlu0 %113
    %vm115 = vcmp.eq.s32.totalorder %v111, %v108
    %vm116 = vcmp.eq.s32.totalorder %v114, %v108
    %v117 = vsel %vm115, 1, 0
    %v118 = vsel %vm116, 1, 0
    %v119 = vcvt.s32.f32 %v117
    %v120 = vcvt.s32.f32 %v118
    %v121 = vld [vmem:[#allocation2] sm:$0xff]
    %v122 = vld [vmem:[#allocation2 + $0x8] sm:$0xff]
    %vm123 = vcmask 523264
    %v125 = vsel %vm123, %v119, 0
    %v128 = vsel %vm123, %v120, 0
    %130 = vmatprep.subr.mxu0 0.0
    %131 = vmatpush1.msra.mxu0 0.0
    %132 = vmatprep.subr.mxu0 0.0
    %133 = vmatpush1.msra.mxu0 0.0
    %134 = vmatprep.subr.mxu0 0.0
    %135 = vmatpush1.msra.mxu0 0.0
    %136 = vmatprep.subr.mxu0 0.0
    %137 = vmatpush1.msra.mxu0 0.0
    %138 = vmatprep.subr.mxu0 0.0
    %139 = vmatpush1.msra.mxu0 0.0
    %140 = vmatprep.subr.mxu0 0.0
    %141 = vmatpush1.msra.mxu0 0.0
    %142 = vmatprep.subr.mxu0 0.0
    %143 = vmatpush1.msra.mxu0 0.0
    %144 = vmatprep.subr.mxu0 0.0
    %145 = vmatpush1.msra.mxu0 0.0
    %146 = vmatprep.subr.mxu0 0.0
    %147 = vmatpush1.msra.mxu0 %v106
    %148 = vmatprep.subr.mxu0 0.0
    %149 = vmatpush1.msra.mxu0 %v105
    %150 = vmatprep.subr.mxu0 0.0
    %151 = vmatpush1.msra.mxu0 %v104
    %152 = vmatprep.subr.mxu0 0.0
    %153 = vmatpush1.msra.mxu0 %v103
    %154 = vmatprep.subr.mxu0 0.0
    %155 = vmatpush1.msra.mxu0 %v102
    %156 = vmatprep.subr.mxu0 0.0
    %157 = vmatpush1.msra.mxu0 %v101
    %158 = vmatprep.subr.mxu0 0.0
    %159 = vmatpush1.msra.mxu0 %v100
    %160 = vmatprep.subr.mxu0 0.0
    %161 = vmatpush1.msra.mxu0 %v99
    %162 = vmatprep.subr.mxu0 0.0
    %163 = vmatpush2.msra.mxu0 0.0
    %164 = vmatprep.subr.mxu0 0.0
    %165 = vmatpush2.msra.mxu0 0.0
    %166 = vmatprep.subr.mxu0 0.0
    %167 = vmatpush2.msra.mxu0 0.0
    %168 = vmatprep.subr.mxu0 0.0
    %169 = vmatpush2.msra.mxu0 0.0
    %170 = vmatprep.subr.mxu0 0.0
    %171 = vmatpush2.msra.mxu0 0.0
    %172 = vmatprep.subr.mxu0 0.0
    %173 = vmatpush2.msra.mxu0 0.0
    %174 = vmatprep.subr.mxu0 0.0
    %175 = vmatpush2.msra.mxu0 0.0
    %176 = vmatprep.subr.mxu0 0.0
    %177 = vmatpush2.msra.mxu0 0.0
    %178 = vmatprep.subr.mxu0 0.0
    %179 = vmatpush2.msra.mxu0 0.0
    %180 = vmatprep.subr.mxu0 0.0
    %181 = vmatpush2.msra.mxu0 0.0
    %182 = vmatprep.subr.mxu0 0.0
    %183 = vmatpush2.msra.mxu0 0.0
    %184 = vmatprep.subr.mxu0 0.0
    %185 = vmatpush2.msra.mxu0 0.0
    %186 = vmatprep.subr.mxu0 0.0
    %187 = vmatpush2.msra.mxu0 0.0
    %188 = vmatprep.subr.mxu0 0.0
    %189 = vmatpush2.msra.mxu0 0.0
    %190 = vmatprep.subr.mxu0 0.0
    %191 = vmatpush2.msra.mxu0 0.0
    %192 = vmatprep.subr.mxu0 0.0
    %193 = vmatpush2.msra.mxu0 0.0
    %194 = vmatprep.mubr.f32.mxu0 0.0
    %195 = vmatmul.mubr.f32.gmra.mxu0 %v125
    %v196 = vpop.f32.mrf.mxu0
    %v197 = vadd.f32 0.0, %v196
    %v198 = vpop.f32.mrf.mxu0
    %199 = vmatprep.mubr.f32.mxu0 0.0
    %200 = vmatmul.mubr.f32.gmra.mxu0 %v128
    %v201 = vpop.f32.mrf.mxu0
    %v202 = vadd.f32 0.0, %v201
    %v203 = vpop.f32.mrf.mxu0
    %204 = vdwg.mxu0
    %v205 = vadd.f32 %v121, %v197
    %v206 = vadd.f32 %v122, %v202
    %207 = vst [vmem:[#allocation2] sm:$0xff] %v205
    %208 = vst [vmem:[#allocation2 + $0x8] sm:$0xff] %v206
    %v209 = vld [vmem:[#allocation2] sm:$0xff]
    %v210 = vld [vmem:[#allocation2 + $0x8] sm:$0xff]
    %211 = vst [vmem:[#allocation10] sm:$0xff] %v209
    %212 = vst [vmem:[#allocation10 + $0x8] sm:$0xff] %v210
    // Predicated region
    $region30: #{tpu_custom_call.1} parent=1 // pred_check
      _
    $region31: #{tpu_custom_call.1} parent=1 // pred_check_branch
      %214 = sbr.rel (0) target = $region33
    $region32: #{tpu_custom_call.1} parent=1 // pred_region
      %s216 = ssub.s32 256, 256
      %217 = vsyncadd [#allocation5], %s216
      %s218 = sshll.u32 [#allocation10], 4
      %s219 = int_to_ptr.vmem [resolvable:$true] %s218
      %224 = dma.vmem_to_hbm [thread:$0]  %s219, 256, %s4, [#allocation5], 128, 128, 8
    $region33: #{tpu_custom_call.1} parent=1 // pred_fallthru
      _
    // Predicated region
    $region34: #{tpu_custom_call.1} parent=1 // pred_check
      _
    $region35: #{tpu_custom_call.1} parent=1 // pred_check_branch
      %226 = sbr.rel (0) target = $region37
    $region36: #{tpu_custom_call.1} parent=1 // pred_region
      %227 = dma.done [#allocation5], 256
    $region37: #{tpu_custom_call.1} parent=1 // pred_fallthru
      _
    %228 = vsyncpa [#allocation4], 1
    %229 = vsyncpa [#allocation9], 1
    %230 = vsyncpa [#allocation5], 1
    %231 = vsyncpa [#allocation6], 1

</llo_original>
